<compile_context>
chip_gen: v7x
topology: tpu7x:2x2x1
jax: 0.10.0
libtpu: 0.0.40
codegen_flags: <defaults>
</compile_context>

<pallas_src>
import functools

import jax
import jax.numpy as jnp
from jax.experimental import pallas as pl
from jax.experimental.pallas import tpu as pltpu


def lstm_seq_kernel(x_ref, wih_ref, whh_ref, b_ref, wout_ref, bout_ref,
                    o_ref, hs_sc, *, T, B, H):
    """Whole-sequence LSTM + output Linear in one kernel invocation.

    x_ref   : (T*B, Din)  time-major flattened concatenated input
    wih_ref : (Din, 4H)   fused input->gate weights, gate order (i, f, g, o) like PyTorch
    whh_ref : (H, 4H)     fused hidden->gate weights
    b_ref   : (1, 4H)     combined bias (b_ih + b_hh)
    wout_ref: (H, 2)      output Linear weight (transposed)
    bout_ref: (1, 2)      output Linear bias
    o_ref   : (T*B, 2)    per-timestep outputs (time-major flattened)
    hs_sc   : (T*B, H)    VMEM scratch holding all hidden states
    """
    # Hoisted input projection (+ bias, added once) for every timestep: one MXU call.
    xw = jnp.dot(x_ref[...], wih_ref[...],
                 preferred_element_type=jnp.float32) + b_ref[...]        # (T*B, 4H)

    w_hh = whh_ref[...]
    h = jnp.zeros((B, H), jnp.float32)
    c = jnp.zeros((B, H), jnp.float32)

    # Fully unrolled recurrence (T small & static): only h @ W_hh is on the serial path.
    for t in range(T):
        z = xw[t * B:(t + 1) * B, :] + jnp.dot(
            h, w_hh, preferred_element_type=jnp.float32)                 # (B, 4H)
        i_g = jax.nn.sigmoid(z[:, 0 * H:1 * H])
        f_g = jax.nn.sigmoid(z[:, 1 * H:2 * H])
        g_g = jnp.tanh(z[:, 2 * H:3 * H])
        o_g = jax.nn.sigmoid(z[:, 3 * H:4 * H])
        c = f_g * c + i_g * g_g
        h = o_g * jnp.tanh(c)
        hs_sc[t * B:(t + 1) * B, :] = h

    # Dropout (eval mode) == identity; Linear(H, 2) over all timesteps at once, then a
    # single output write (one writeback for the whole sequence).
    o_ref[...] = (jnp.dot(hs_sc[...], wout_ref[...],
                          preferred_element_type=jnp.float32)
                  + bout_ref[...]).astype(o_ref.dtype)


@jax.jit
def prediction_model_forward(static_input, dynamic_input, params):
    """static_input: [B, S], dynamic_input: [B, T, D] -> [B, T, 2] (matches PyTorch)."""
    B, T, d_dyn = dynamic_input.shape
    d_static = static_input.shape[1]
    d_in = d_static + d_dyn
    H = params["w_hh"].shape[0]

    # Glue: repeat static over time, concat along features (PyTorch: cat(..., dim=2)),
    # go time-major and flatten (T, B) so the kernel sees a single 2D VMEM block.
    static_rep = jnp.broadcast_to(static_input[:, None, :], (B, T, d_static))
    state = jnp.concatenate([static_rep, dynamic_input], axis=2)         # [B, T, Din]
    x2d = jnp.transpose(state, (1, 0, 2)).reshape(T * B, d_in)           # [T*B, Din]

    out2d = pl.pallas_call(
        functools.partial(lstm_seq_kernel, T=T, B=B, H=H),
        out_shape=jax.ShapeDtypeStruct((T * B, 2), jnp.float32),
        scratch_shapes=[pltpu.VMEM((T * B, H), jnp.float32)],            # hidden states
    )(x2d, params["w_ih"], params["w_hh"], params["b"],
      params["w_out"], params["b_out"])

    return jnp.transpose(out2d.reshape(T, B, 2), (1, 0, 2))              # [B, T, 2]


def init_params(key, static_size, dynamic_size, hidden_size):
    """Deterministic init mirroring PyTorch shapes, stored pre-fused / pre-transposed:
       weight_ih_l0 [4H, Din] -> (Din, 4H); weight_hh_l0 [4H, H] -> (H, 4H);
       biases [4H] -> combined (1, 4H); Linear(H, 2) -> (H, 2) + (1, 2)."""
    d_in = static_size + dynamic_size
    H = hidden_size
    k = 1.0 / jnp.sqrt(jnp.float32(H))
    keys = jax.random.split(key, 6)
    w_ih = jax.random.uniform(keys[0], (d_in, 4 * H), jnp.float32, -k, k)
    w_hh = jax.random.uniform(keys[1], (H, 4 * H), jnp.float32, -k, k)
    b_ih = jax.random.uniform(keys[2], (1, 4 * H), jnp.float32, -k, k)
    b_hh = jax.random.uniform(keys[3], (1, 4 * H), jnp.float32, -k, k)
    w_out = jax.random.uniform(keys[4], (H, 2), jnp.float32, -k, k)
    b_out = jax.random.uniform(keys[5], (1, 2), jnp.float32, -k, k)
    return {"w_ih": w_ih, "w_hh": w_hh, "b": b_ih + b_hh,
            "w_out": w_out, "b_out": b_out}


def reference_forward(static_input, dynamic_input, params):
    """Pure-JAX reference (lax.scan LSTM, fused-gate layout) for correctness checking."""
    B, T, _ = dynamic_input.shape
    H = params["w_hh"].shape[0]
    static_rep = jnp.broadcast_to(static_input[:, None, :],
                                  (B, T, static_input.shape[1]))
    x = jnp.concatenate([static_rep, dynamic_input], axis=2)             # [B, T, Din]
    x = jnp.transpose(x, (1, 0, 2))                                      # [T, B, Din]

    def step(carry, x_t):
        h, c = carry
        z = x_t @ params["w_ih"] + h @ params["w_hh"] + params["b"]
        i = jax.nn.sigmoid(z[:, 0 * H:1 * H])
        f = jax.nn.sigmoid(z[:, 1 * H:2 * H])
        g = jnp.tanh(z[:, 2 * H:3 * H])
        o = jax.nn.sigmoid(z[:, 3 * H:4 * H])
        c_new = f * c + i * g
        h_new = o * jnp.tanh(c_new)
        return (h_new, c_new), h_new

    init = (jnp.zeros((B, H), jnp.float32), jnp.zeros((B, H), jnp.float32))
    _, hs = jax.lax.scan(step, init, x)                                  # [T, B, H]
    out = hs @ params["w_out"] + params["b_out"]                         # [T, B, 2]
    return jnp.transpose(out, (1, 0, 2))                                 # [B, T, 2]


if __name__ == "__main__":
    # Small shapes consistent with the module's forward signature.
    B, T = 2, 8
    static_size, dynamic_size, hidden_size = 4, 12, 32

    key = jax.random.PRNGKey(0)
    k_s, k_d, k_p = jax.random.split(key, 3)
    static_input = jax.random.normal(k_s, (B, static_size), jnp.float32)
    dynamic_input = jax.random.normal(k_d, (B, T, dynamic_size), jnp.float32)
    params = init_params(k_p, static_size, dynamic_size, hidden_size)

    out = prediction_model_forward(static_input, dynamic_input, params)
    out = jax.block_until_ready(out)
    assert out.shape == (B, T, 2), out.shape

    ref = reference_forward(static_input, dynamic_input, params)
    assert jnp.allclose(out, ref, atol=1e-4, rtol=1e-4), \
        f"max abs err {jnp.max(jnp.abs(out - ref))}"

    print("KERNEL_OK")
</pallas_src>

<mosaic_0001>
module attributes {stable_mosaic.version = 11 : i64} {
  func.func @lstm_seq_kernel(%arg0: memref<16x16xf32, #tpu.memory_space<vmem>>, %arg1: memref<16x128xf32, #tpu.memory_space<vmem>>, %arg2: memref<32x128xf32, #tpu.memory_space<vmem>>, %arg3: memref<1x128xf32, #tpu.memory_space<vmem>>, %arg4: memref<32x2xf32, #tpu.memory_space<vmem>>, %arg5: memref<1x2xf32, #tpu.memory_space<vmem>>, %arg6: memref<16x2xf32, #tpu.memory_space<vmem>>, %arg7: memref<16x32xf32, #tpu.memory_space<vmem>>) attributes {dimension_semantics = [], scalar_prefetch = 0 : i64, scratch_operands = 1 : i64, tpu.core_type = #tpu.core_type<tc>} {
    %c0 = arith.constant 0 : index
    %c0_0 = arith.constant 0 : index
    %0 = vector.load %arg0[%c0, %c0_0] : memref<16x16xf32, #tpu.memory_space<vmem>>, vector<16x16xf32>
    %c0_1 = arith.constant 0 : index
    %c0_2 = arith.constant 0 : index
    %1 = vector.load %arg1[%c0_1, %c0_2] : memref<16x128xf32, #tpu.memory_space<vmem>>, vector<16x128xf32>
    %cst = arith.constant dense<0.000000e+00> : vector<16x128xf32>
    %2 = tpu.matmul %0, %1, %cst {dimension_numbers = #tpu.dot_dimension_numbers<[1], [0], [0], [1], [0, 0, 1, 1], [], []>} : vector<16x16xf32>, vector<16x128xf32>, vector<16x128xf32> -> vector<16x128xf32>
    %c0_3 = arith.constant 0 : index
    %c0_4 = arith.constant 0 : index
    %3 = vector.load %arg3[%c0_3, %c0_4] : memref<1x128xf32, #tpu.memory_space<vmem>>, vector<1x128xf32>
    %4 = vector.broadcast %3 : vector<1x128xf32> to vector<16x128xf32>
    %5 = arith.addf %2, %4 : vector<16x128xf32>
    %c0_5 = arith.constant 0 : index
    %c0_6 = arith.constant 0 : index
    %6 = vector.load %arg2[%c0_5, %c0_6] : memref<32x128xf32, #tpu.memory_space<vmem>>, vector<32x128xf32>
    %cst_7 = arith.constant 0.000000e+00 : f32
    %7 = vector.broadcast %cst_7 : f32 to vector<2x32xf32>
    %cst_8 = arith.constant 0.000000e+00 : f32
    %8 = vector.broadcast %cst_8 : f32 to vector<2x32xf32>
    %9 = vector.extract_strided_slice %5 {offsets = [0, 0], sizes = [2, 128], strides = [1, 1]} : vector<16x128xf32> to vector<2x128xf32>
    %cst_9 = arith.constant dense<0.000000e+00> : vector<2x128xf32>
    %10 = tpu.matmul %7, %6, %cst_9 {dimension_numbers = #tpu.dot_dimension_numbers<[1], [0], [0], [1], [0, 0, 1, 1], [], []>} : vector<2x32xf32>, vector<32x128xf32>, vector<2x128xf32> -> vector<2x128xf32>
    %11 = arith.addf %9, %10 : vector<2x128xf32>
    %12 = vector.extract_strided_slice %11 {offsets = [0, 0], sizes = [2, 32], strides = [1, 1]} : vector<2x128xf32> to vector<2x32xf32>
    %13 = arith.negf %12 : vector<2x32xf32>
    %14 = math.exp %13 : vector<2x32xf32>
    %cst_10 = arith.constant 1.000000e+00 : f32
    %15 = vector.broadcast %cst_10 : f32 to vector<2x32xf32>
    %16 = arith.addf %15, %14 : vector<2x32xf32>
    %17 = arith.divf %15, %16 : vector<2x32xf32>
    %18 = vector.extract_strided_slice %11 {offsets = [0, 32], sizes = [2, 32], strides = [1, 1]} : vector<2x128xf32> to vector<2x32xf32>
    %19 = arith.negf %18 : vector<2x32xf32>
    %20 = math.exp %19 : vector<2x32xf32>
    %cst_11 = arith.constant 1.000000e+00 : f32
    %21 = vector.broadcast %cst_11 : f32 to vector<2x32xf32>
    %22 = arith.addf %21, %20 : vector<2x32xf32>
    %23 = arith.divf %21, %22 : vector<2x32xf32>
    %24 = vector.extract_strided_slice %11 {offsets = [0, 64], sizes = [2, 32], strides = [1, 1]} : vector<2x128xf32> to vector<2x32xf32>
    %25 = math.tanh %24 : vector<2x32xf32>
    %26 = vector.extract_strided_slice %11 {offsets = [0, 96], sizes = [2, 32], strides = [1, 1]} : vector<2x128xf32> to vector<2x32xf32>
    %27 = arith.negf %26 : vector<2x32xf32>
    %28 = math.exp %27 : vector<2x32xf32>
    %cst_12 = arith.constant 1.000000e+00 : f32
    %29 = vector.broadcast %cst_12 : f32 to vector<2x32xf32>
    %30 = arith.addf %29, %28 : vector<2x32xf32>
    %31 = arith.divf %29, %30 : vector<2x32xf32>
    %32 = arith.mulf %23, %8 : vector<2x32xf32>
    %33 = arith.mulf %17, %25 : vector<2x32xf32>
    %34 = arith.addf %32, %33 : vector<2x32xf32>
    %35 = math.tanh %34 : vector<2x32xf32>
    %36 = arith.mulf %31, %35 : vector<2x32xf32>
    %c0_13 = arith.constant 0 : index
    %c0_14 = arith.constant 0 : index
    %37 = vector.load %arg7[%c0_13, %c0_14] : memref<16x32xf32, #tpu.memory_space<vmem>>, vector<2x32xf32>
    tpu.vector_store %arg7[%c0_13, %c0_14], %36 {strides = array<i32>} : memref<16x32xf32, #tpu.memory_space<vmem>>, vector<2x32xf32>,
    %38 = vector.extract_strided_slice %5 {offsets = [2, 0], sizes = [2, 128], strides = [1, 1]} : vector<16x128xf32> to vector<2x128xf32>
    %cst_15 = arith.constant dense<0.000000e+00> : vector<2x128xf32>
    %39 = tpu.matmul %36, %6, %cst_15 {dimension_numbers = #tpu.dot_dimension_numbers<[1], [0], [0], [1], [0, 0, 1, 1], [], []>} : vector<2x32xf32>, vector<32x128xf32>, vector<2x128xf32> -> vector<2x128xf32>
    %40 = arith.addf %38, %39 : vector<2x128xf32>
    %41 = vector.extract_strided_slice %40 {offsets = [0, 0], sizes = [2, 32], strides = [1, 1]} : vector<2x128xf32> to vector<2x32xf32>
    %42 = arith.negf %41 : vector<2x32xf32>
    %43 = math.exp %42 : vector<2x32xf32>
    %cst_16 = arith.constant 1.000000e+00 : f32
    %44 = vector.broadcast %cst_16 : f32 to vector<2x32xf32>
    %45 = arith.addf %44, %43 : vector<2x32xf32>
    %46 = arith.divf %44, %45 : vector<2x32xf32>
    %47 = vector.extract_strided_slice %40 {offsets = [0, 32], sizes = [2, 32], strides = [1, 1]} : vector<2x128xf32> to vector<2x32xf32>
    %48 = arith.negf %47 : vector<2x32xf32>
    %49 = math.exp %48 : vector<2x32xf32>
    %cst_17 = arith.constant 1.000000e+00 : f32
    %50 = vector.broadcast %cst_17 : f32 to vector<2x32xf32>
    %51 = arith.addf %50, %49 : vector<2x32xf32>
    %52 = arith.divf %50, %51 : vector<2x32xf32>
    %53 = vector.extract_strided_slice %40 {offsets = [0, 64], sizes = [2, 32], strides = [1, 1]} : vector<2x128xf32> to vector<2x32xf32>
    %54 = math.tanh %53 : vector<2x32xf32>
    %55 = vector.extract_strided_slice %40 {offsets = [0, 96], sizes = [2, 32], strides = [1, 1]} : vector<2x128xf32> to vector<2x32xf32>
    %56 = arith.negf %55 : vector<2x32xf32>
    %57 = math.exp %56 : vector<2x32xf32>
    %cst_18 = arith.constant 1.000000e+00 : f32
    %58 = vector.broadcast %cst_18 : f32 to vector<2x32xf32>
    %59 = arith.addf %58, %57 : vector<2x32xf32>
    %60 = arith.divf %58, %59 : vector<2x32xf32>
    %61 = arith.mulf %52, %34 : vector<2x32xf32>
    %62 = arith.mulf %46, %54 : vector<2x32xf32>
    %63 = arith.addf %61, %62 : vector<2x32xf32>
    %64 = math.tanh %63 : vector<2x32xf32>
    %65 = arith.mulf %60, %64 : vector<2x32xf32>
    %c2 = arith.constant 2 : index
    %c0_19 = arith.constant 0 : index
    %66 = vector.load %arg7[%c2, %c0_19] : memref<16x32xf32, #tpu.memory_space<vmem>>, vector<2x32xf32>
    tpu.vector_store %arg7[%c2, %c0_19], %65 {strides = array<i32>} : memref<16x32xf32, #tpu.memory_space<vmem>>, vector<2x32xf32>,
    %67 = vector.extract_strided_slice %5 {offsets = [4, 0], sizes = [2, 128], strides = [1, 1]} : vector<16x128xf32> to vector<2x128xf32>
    %cst_20 = arith.constant dense<0.000000e+00> : vector<2x128xf32>
    %68 = tpu.matmul %65, %6, %cst_20 {dimension_numbers = #tpu.dot_dimension_numbers<[1], [0], [0], [1], [0, 0, 1, 1], [], []>} : vector<2x32xf32>, vector<32x128xf32>, vector<2x128xf32> -> vector<2x128xf32>
    %69 = arith.addf %67, %68 : vector<2x128xf32>
    %70 = vector.extract_strided_slice %69 {offsets = [0, 0], sizes = [2, 32], strides = [1, 1]} : vector<2x128xf32> to vector<2x32xf32>
    %71 = arith.negf %70 : vector<2x32xf32>
    %72 = math.exp %71 : vector<2x32xf32>
    %cst_21 = arith.constant 1.000000e+00 : f32
    %73 = vector.broadcast %cst_21 : f32 to vector<2x32xf32>
    %74 = arith.addf %73, %72 : vector<2x32xf32>
    %75 = arith.divf %73, %74 : vector<2x32xf32>
    %76 = vector.extract_strided_slice %69 {offsets = [0, 32], sizes = [2, 32], strides = [1, 1]} : vector<2x128xf32> to vector<2x32xf32>
    %77 = arith.negf %76 : vector<2x32xf32>
    %78 = math.exp %77 : vector<2x32xf32>
    %cst_22 = arith.constant 1.000000e+00 : f32
    %79 = vector.broadcast %cst_22 : f32 to vector<2x32xf32>
    %80 = arith.addf %79, %78 : vector<2x32xf32>
    %81 = arith.divf %79, %80 : vector<2x32xf32>
    %82 = vector.extract_strided_slice %69 {offsets = [0, 64], sizes = [2, 32], strides = [1, 1]} : vector<2x128xf32> to vector<2x32xf32>
    %83 = math.tanh %82 : vector<2x32xf32>
    %84 = vector.extract_strided_slice %69 {offsets = [0, 96], sizes = [2, 32], strides = [1, 1]} : vector<2x128xf32> to vector<2x32xf32>
    %85 = arith.negf %84 : vector<2x32xf32>
    %86 = math.exp %85 : vector<2x32xf32>
    %cst_23 = arith.constant 1.000000e+00 : f32
    %87 = vector.broadcast %cst_23 : f32 to vector<2x32xf32>
    %88 = arith.addf %87, %86 : vector<2x32xf32>
    %89 = arith.divf %87, %88 : vector<2x32xf32>
    %90 = arith.mulf %81, %63 : vector<2x32xf32>
    %91 = arith.mulf %75, %83 : vector<2x32xf32>
    %92 = arith.addf %90, %91 : vector<2x32xf32>
    %93 = math.tanh %92 : vector<2x32xf32>
    %94 = arith.mulf %89, %93 : vector<2x32xf32>
    %c4 = arith.constant 4 : index
    %c0_24 = arith.constant 0 : index
    %95 = vector.load %arg7[%c4, %c0_24] : memref<16x32xf32, #tpu.memory_space<vmem>>, vector<2x32xf32>
    tpu.vector_store %arg7[%c4, %c0_24], %94 {strides = array<i32>} : memref<16x32xf32, #tpu.memory_space<vmem>>, vector<2x32xf32>,
    %96 = vector.extract_strided_slice %5 {offsets = [6, 0], sizes = [2, 128], strides = [1, 1]} : vector<16x128xf32> to vector<2x128xf32>
    %cst_25 = arith.constant dense<0.000000e+00> : vector<2x128xf32>
    %97 = tpu.matmul %94, %6, %cst_25 {dimension_numbers = #tpu.dot_dimension_numbers<[1], [0], [0], [1], [0, 0, 1, 1], [], []>} : vector<2x32xf32>, vector<32x128xf32>, vector<2x128xf32> -> vector<2x128xf32>
    %98 = arith.addf %96, %97 : vector<2x128xf32>
    %99 = vector.extract_strided_slice %98 {offsets = [0, 0], sizes = [2, 32], strides = [1, 1]} : vector<2x128xf32> to vector<2x32xf32>
    %100 = arith.negf %99 : vector<2x32xf32>
    %101 = math.exp %100 : vector<2x32xf32>
    %cst_26 = arith.constant 1.000000e+00 : f32
    %102 = vector.broadcast %cst_26 : f32 to vector<2x32xf32>
    %103 = arith.addf %102, %101 : vector<2x32xf32>
    %104 = arith.divf %102, %103 : vector<2x32xf32>
    %105 = vector.extract_strided_slice %98 {offsets = [0, 32], sizes = [2, 32], strides = [1, 1]} : vector<2x128xf32> to vector<2x32xf32>
    %106 = arith.negf %105 : vector<2x32xf32>
    %107 = math.exp %106 : vector<2x32xf32>
    %cst_27 = arith.constant 1.000000e+00 : f32
    %108 = vector.broadcast %cst_27 : f32 to vector<2x32xf32>
    %109 = arith.addf %108, %107 : vector<2x32xf32>
    %110 = arith.divf %108, %109 : vector<2x32xf32>
    %111 = vector.extract_strided_slice %98 {offsets = [0, 64], sizes = [2, 32], strides = [1, 1]} : vector<2x128xf32> to vector<2x32xf32>
    %112 = math.tanh %111 : vector<2x32xf32>
    %113 = vector.extract_strided_slice %98 {offsets = [0, 96], sizes = [2, 32], strides = [1, 1]} : vector<2x128xf32> to vector<2x32xf32>
    %114 = arith.negf %113 : vector<2x32xf32>
    %115 = math.exp %114 : vector<2x32xf32>
    %cst_28 = arith.constant 1.000000e+00 : f32
    %116 = vector.broadcast %cst_28 : f32 to vector<2x32xf32>
    %117 = arith.addf %116, %115 : vector<2x32xf32>
    %118 = arith.divf %116, %117 : vector<2x32xf32>
    %119 = arith.mulf %110, %92 : vector<2x32xf32>
    %120 = arith.mulf %104, %112 : vector<2x32xf32>
    %121 = arith.addf %119, %120 : vector<2x32xf32>
    %122 = math.tanh %121 : vector<2x32xf32>
    %123 = arith.mulf %118, %122 : vector<2x32xf32>
    %c6 = arith.constant 6 : index
    %c0_29 = arith.constant 0 : index
    %124 = vector.load %arg7[%c6, %c0_29] : memref<16x32xf32, #tpu.memory_space<vmem>>, vector<2x32xf32>
    tpu.vector_store %arg7[%c6, %c0_29], %123 {strides = array<i32>} : memref<16x32xf32, #tpu.memory_space<vmem>>, vector<2x32xf32>,
    %125 = vector.extract_strided_slice %5 {offsets = [8, 0], sizes = [2, 128], strides = [1, 1]} : vector<16x128xf32> to vector<2x128xf32>
    %cst_30 = arith.constant dense<0.000000e+00> : vector<2x128xf32>
    %126 = tpu.matmul %123, %6, %cst_30 {dimension_numbers = #tpu.dot_dimension_numbers<[1], [0], [0], [1], [0, 0, 1, 1], [], []>} : vector<2x32xf32>, vector<32x128xf32>, vector<2x128xf32> -> vector<2x128xf32>
    %127 = arith.addf %125, %126 : vector<2x128xf32>
    %128 = vector.extract_strided_slice %127 {offsets = [0, 0], sizes = [2, 32], strides = [1, 1]} : vector<2x128xf32> to vector<2x32xf32>
    %129 = arith.negf %128 : vector<2x32xf32>
    %130 = math.exp %129 : vector<2x32xf32>
    %cst_31 = arith.constant 1.000000e+00 : f32
    %131 = vector.broadcast %cst_31 : f32 to vector<2x32xf32>
    %132 = arith.addf %131, %130 : vector<2x32xf32>
    %133 = arith.divf %131, %132 : vector<2x32xf32>
    %134 = vector.extract_strided_slice %127 {offsets = [0, 32], sizes = [2, 32], strides = [1, 1]} : vector<2x128xf32> to vector<2x32xf32>
    %135 = arith.negf %134 : vector<2x32xf32>
    %136 = math.exp %135 : vector<2x32xf32>
    %cst_32 = arith.constant 1.000000e+00 : f32
    %137 = vector.broadcast %cst_32 : f32 to vector<2x32xf32>
    %138 = arith.addf %137, %136 : vector<2x32xf32>
    %139 = arith.divf %137, %138 : vector<2x32xf32>
    %140 = vector.extract_strided_slice %127 {offsets = [0, 64], sizes = [2, 32], strides = [1, 1]} : vector<2x128xf32> to vector<2x32xf32>
    %141 = math.tanh %140 : vector<2x32xf32>
    %142 = vector.extract_strided_slice %127 {offsets = [0, 96], sizes = [2, 32], strides = [1, 1]} : vector<2x128xf32> to vector<2x32xf32>
    %143 = arith.negf %142 : vector<2x32xf32>
    %144 = math.exp %143 : vector<2x32xf32>
    %cst_33 = arith.constant 1.000000e+00 : f32
    %145 = vector.broadcast %cst_33 : f32 to vector<2x32xf32>
    %146 = arith.addf %145, %144 : vector<2x32xf32>
    %147 = arith.divf %145, %146 : vector<2x32xf32>
    %148 = arith.mulf %139, %121 : vector<2x32xf32>
    %149 = arith.mulf %133, %141 : vector<2x32xf32>
    %150 = arith.addf %148, %149 : vector<2x32xf32>
    %151 = math.tanh %150 : vector<2x32xf32>
    %152 = arith.mulf %147, %151 : vector<2x32xf32>
    %c8 = arith.constant 8 : index
    %c0_34 = arith.constant 0 : index
    %153 = vector.load %arg7[%c8, %c0_34] : memref<16x32xf32, #tpu.memory_space<vmem>>, vector<2x32xf32>
    tpu.vector_store %arg7[%c8, %c0_34], %152 {strides = array<i32>} : memref<16x32xf32, #tpu.memory_space<vmem>>, vector<2x32xf32>,
    %154 = vector.extract_strided_slice %5 {offsets = [10, 0], sizes = [2, 128], strides = [1, 1]} : vector<16x128xf32> to vector<2x128xf32>
    %cst_35 = arith.constant dense<0.000000e+00> : vector<2x128xf32>
    %155 = tpu.matmul %152, %6, %cst_35 {dimension_numbers = #tpu.dot_dimension_numbers<[1], [0], [0], [1], [0, 0, 1, 1], [], []>} : vector<2x32xf32>, vector<32x128xf32>, vector<2x128xf32> -> vector<2x128xf32>
    %156 = arith.addf %154, %155 : vector<2x128xf32>
    %157 = vector.extract_strided_slice %156 {offsets = [0, 0], sizes = [2, 32], strides = [1, 1]} : vector<2x128xf32> to vector<2x32xf32>
    %158 = arith.negf %157 : vector<2x32xf32>
    %159 = math.exp %158 : vector<2x32xf32>
    %cst_36 = arith.constant 1.000000e+00 : f32
    %160 = vector.broadcast %cst_36 : f32 to vector<2x32xf32>
    %161 = arith.addf %160, %159 : vector<2x32xf32>
    %162 = arith.divf %160, %161 : vector<2x32xf32>
    %163 = vector.extract_strided_slice %156 {offsets = [0, 32], sizes = [2, 32], strides = [1, 1]} : vector<2x128xf32> to vector<2x32xf32>
    %164 = arith.negf %163 : vector<2x32xf32>
    %165 = math.exp %164 : vector<2x32xf32>
    %cst_37 = arith.constant 1.000000e+00 : f32
    %166 = vector.broadcast %cst_37 : f32 to vector<2x32xf32>
    %167 = arith.addf %166, %165 : vector<2x32xf32>
    %168 = arith.divf %166, %167 : vector<2x32xf32>
    %169 = vector.extract_strided_slice %156 {offsets = [0, 64], sizes = [2, 32], strides = [1, 1]} : vector<2x128xf32> to vector<2x32xf32>
    %170 = math.tanh %169 : vector<2x32xf32>
    %171 = vector.extract_strided_slice %156 {offsets = [0, 96], sizes = [2, 32], strides = [1, 1]} : vector<2x128xf32> to vector<2x32xf32>
    %172 = arith.negf %171 : vector<2x32xf32>
    %173 = math.exp %172 : vector<2x32xf32>
    %cst_38 = arith.constant 1.000000e+00 : f32
    %174 = vector.broadcast %cst_38 : f32 to vector<2x32xf32>
    %175 = arith.addf %174, %173 : vector<2x32xf32>
    %176 = arith.divf %174, %175 : vector<2x32xf32>
    %177 = arith.mulf %168, %150 : vector<2x32xf32>
    %178 = arith.mulf %162, %170 : vector<2x32xf32>
    %179 = arith.addf %177, %178 : vector<2x32xf32>
    %180 = math.tanh %179 : vector<2x32xf32>
    %181 = arith.mulf %176, %180 : vector<2x32xf32>
    %c10 = arith.constant 10 : index
    %c0_39 = arith.constant 0 : index
    %182 = vector.load %arg7[%c10, %c0_39] : memref<16x32xf32, #tpu.memory_space<vmem>>, vector<2x32xf32>
    tpu.vector_store %arg7[%c10, %c0_39], %181 {strides = array<i32>} : memref<16x32xf32, #tpu.memory_space<vmem>>, vector<2x32xf32>,
    %183 = vector.extract_strided_slice %5 {offsets = [12, 0], sizes = [2, 128], strides = [1, 1]} : vector<16x128xf32> to vector<2x128xf32>
    %cst_40 = arith.constant dense<0.000000e+00> : vector<2x128xf32>
    %184 = tpu.matmul %181, %6, %cst_40 {dimension_numbers = #tpu.dot_dimension_numbers<[1], [0], [0], [1], [0, 0, 1, 1], [], []>} : vector<2x32xf32>, vector<32x128xf32>, vector<2x128xf32> -> vector<2x128xf32>
    %185 = arith.addf %183, %184 : vector<2x128xf32>
    %186 = vector.extract_strided_slice %185 {offsets = [0, 0], sizes = [2, 32], strides = [1, 1]} : vector<2x128xf32> to vector<2x32xf32>
    %187 = arith.negf %186 : vector<2x32xf32>
    %188 = math.exp %187 : vector<2x32xf32>
    %cst_41 = arith.constant 1.000000e+00 : f32
    %189 = vector.broadcast %cst_41 : f32 to vector<2x32xf32>
    %190 = arith.addf %189, %188 : vector<2x32xf32>
    %191 = arith.divf %189, %190 : vector<2x32xf32>
    %192 = vector.extract_strided_slice %185 {offsets = [0, 32], sizes = [2, 32], strides = [1, 1]} : vector<2x128xf32> to vector<2x32xf32>
    %193 = arith.negf %192 : vector<2x32xf32>
    %194 = math.exp %193 : vector<2x32xf32>
    %cst_42 = arith.constant 1.000000e+00 : f32
    %195 = vector.broadcast %cst_42 : f32 to vector<2x32xf32>
    %196 = arith.addf %195, %194 : vector<2x32xf32>
    %197 = arith.divf %195, %196 : vector<2x32xf32>
    %198 = vector.extract_strided_slice %185 {offsets = [0, 64], sizes = [2, 32], strides = [1, 1]} : vector<2x128xf32> to vector<2x32xf32>
    %199 = math.tanh %198 : vector<2x32xf32>
    %200 = vector.extract_strided_slice %185 {offsets = [0, 96], sizes = [2, 32], strides = [1, 1]} : vector<2x128xf32> to vector<2x32xf32>
    %201 = arith.negf %200 : vector<2x32xf32>
    %202 = math.exp %201 : vector<2x32xf32>
    %cst_43 = arith.constant 1.000000e+00 : f32
    %203 = vector.broadcast %cst_43 : f32 to vector<2x32xf32>
    %204 = arith.addf %203, %202 : vector<2x32xf32>
    %205 = arith.divf %203, %204 : vector<2x32xf32>
    %206 = arith.mulf %197, %179 : vector<2x32xf32>
    %207 = arith.mulf %191, %199 : vector<2x32xf32>
    %208 = arith.addf %206, %207 : vector<2x32xf32>
    %209 = math.tanh %208 : vector<2x32xf32>
    %210 = arith.mulf %205, %209 : vector<2x32xf32>
    %c12 = arith.constant 12 : index
    %c0_44 = arith.constant 0 : index
    %211 = vector.load %arg7[%c12, %c0_44] : memref<16x32xf32, #tpu.memory_space<vmem>>, vector<2x32xf32>
    tpu.vector_store %arg7[%c12, %c0_44], %210 {strides = array<i32>} : memref<16x32xf32, #tpu.memory_space<vmem>>, vector<2x32xf32>,
    %212 = vector.extract_strided_slice %5 {offsets = [14, 0], sizes = [2, 128], strides = [1, 1]} : vector<16x128xf32> to vector<2x128xf32>
    %cst_45 = arith.constant dense<0.000000e+00> : vector<2x128xf32>
    %213 = tpu.matmul %210, %6, %cst_45 {dimension_numbers = #tpu.dot_dimension_numbers<[1], [0], [0], [1], [0, 0, 1, 1], [], []>} : vector<2x32xf32>, vector<32x128xf32>, vector<2x128xf32> -> vector<2x128xf32>
    %214 = arith.addf %212, %213 : vector<2x128xf32>
    %215 = vector.extract_strided_slice %214 {offsets = [0, 0], sizes = [2, 32], strides = [1, 1]} : vector<2x128xf32> to vector<2x32xf32>
    %216 = arith.negf %215 : vector<2x32xf32>
    %217 = math.exp %216 : vector<2x32xf32>
    %cst_46 = arith.constant 1.000000e+00 : f32
    %218 = vector.broadcast %cst_46 : f32 to vector<2x32xf32>
    %219 = arith.addf %218, %217 : vector<2x32xf32>
    %220 = arith.divf %218, %219 : vector<2x32xf32>
    %221 = vector.extract_strided_slice %214 {offsets = [0, 32], sizes = [2, 32], strides = [1, 1]} : vector<2x128xf32> to vector<2x32xf32>
    %222 = arith.negf %221 : vector<2x32xf32>
    %223 = math.exp %222 : vector<2x32xf32>
    %cst_47 = arith.constant 1.000000e+00 : f32
    %224 = vector.broadcast %cst_47 : f32 to vector<2x32xf32>
    %225 = arith.addf %224, %223 : vector<2x32xf32>
    %226 = arith.divf %224, %225 : vector<2x32xf32>
    %227 = vector.extract_strided_slice %214 {offsets = [0, 64], sizes = [2, 32], strides = [1, 1]} : vector<2x128xf32> to vector<2x32xf32>
    %228 = math.tanh %227 : vector<2x32xf32>
    %229 = vector.extract_strided_slice %214 {offsets = [0, 96], sizes = [2, 32], strides = [1, 1]} : vector<2x128xf32> to vector<2x32xf32>
    %230 = arith.negf %229 : vector<2x32xf32>
    %231 = math.exp %230 : vector<2x32xf32>
    %cst_48 = arith.constant 1.000000e+00 : f32
    %232 = vector.broadcast %cst_48 : f32 to vector<2x32xf32>
    %233 = arith.addf %232, %231 : vector<2x32xf32>
    %234 = arith.divf %232, %233 : vector<2x32xf32>
    %235 = arith.mulf %226, %208 : vector<2x32xf32>
    %236 = arith.mulf %220, %228 : vector<2x32xf32>
    %237 = arith.addf %235, %236 : vector<2x32xf32>
    %238 = math.tanh %237 : vector<2x32xf32>
    %239 = arith.mulf %234, %238 : vector<2x32xf32>
    %c14 = arith.constant 14 : index
    %c0_49 = arith.constant 0 : index
    %240 = vector.load %arg7[%c14, %c0_49] : memref<16x32xf32, #tpu.memory_space<vmem>>, vector<2x32xf32>
    tpu.vector_store %arg7[%c14, %c0_49], %239 {strides = array<i32>} : memref<16x32xf32, #tpu.memory_space<vmem>>, vector<2x32xf32>,
    %c0_50 = arith.constant 0 : index
    %c0_51 = arith.constant 0 : index
    %241 = vector.load %arg7[%c0_50, %c0_51] : memref<16x32xf32, #tpu.memory_space<vmem>>, vector<16x32xf32>
    %c0_52 = arith.constant 0 : index
    %c0_53 = arith.constant 0 : index
    %242 = vector.load %arg4[%c0_52, %c0_53] : memref<32x2xf32, #tpu.memory_space<vmem>>, vector<32x2xf32>
    %cst_54 = arith.constant dense<0.000000e+00> : vector<16x2xf32>
    %243 = tpu.matmul %241, %242, %cst_54 {dimension_numbers = #tpu.dot_dimension_numbers<[1], [0], [0], [1], [0, 0, 1, 1], [], []>} : vector<16x32xf32>, vector<32x2xf32>, vector<16x2xf32> -> vector<16x2xf32>
    %c0_55 = arith.constant 0 : index
    %c0_56 = arith.constant 0 : index
    %244 = vector.load %arg5[%c0_55, %c0_56] : memref<1x2xf32, #tpu.memory_space<vmem>>, vector<1x2xf32>
    %245 = vector.broadcast %244 : vector<1x2xf32> to vector<16x2xf32>
    %246 = arith.addf %243, %245 : vector<16x2xf32>
    %c0_57 = arith.constant 0 : index
    %c0_58 = arith.constant 0 : index
    %247 = vector.load %arg6[%c0_57, %c0_58] : memref<16x2xf32, #tpu.memory_space<vmem>>, vector<16x2xf32>
    tpu.vector_store %arg6[%c0_57, %c0_58], %246 {strides = array<i32>} : memref<16x2xf32, #tpu.memory_space<vmem>>, vector<16x2xf32>,
    return
  }
}

</mosaic_0001>

<llo_original>
// kernel: prediction_model_forward.1
$region0: #{prediction_model_forward.1}
  #allocation0 [shape = 'u32[]', space=smem, size = 0x4, offset = 0x4, fixed_abs, tag = 'smem constant byte address 0x4 - core index']
  #allocation1 [shape = 'u32[144,128]{1,0:T(1,128)}', space=vmem, size = 0x12000, scoped, tag = 'internal scratch']
  #allocation2 [shape = 'f32[16,32]{1,0:T(8,128)}', space=vmem, size = 0x2000, scoped, tag = 'scratch operand']
  %s0 = inlined_call_operand.vmem [shape: f32[16,16], index: 0, kind: input, shape index: {}]
  %s1 = inlined_call_operand.vmem [shape: f32[16,128], index: 1, kind: input, shape index: {}]
  %s2 = inlined_call_operand.vmem [shape: f32[32,128], index: 2, kind: input, shape index: {}]
  %s3 = inlined_call_operand.vmem [shape: f32[1,128], index: 3, kind: input, shape index: {}]
  %s4 = inlined_call_operand.vmem [shape: f32[32,2], index: 4, kind: input, shape index: {}]
  %s5 = inlined_call_operand.vmem [shape: f32[1,2], index: 5, kind: input, shape index: {}]
  %s6 = inlined_call_operand.vmem [shape: f32[16,2], index: 6, kind: output, shape index: {}]
  %s7 = sld [smem:[#allocation0]]
  $region34: #{prediction_model_forward.1} parent=0
    _
  %s9 = ssub.s32 1, %s7
  %s10 = scalar_select 0, %s9, %s7
  // Predicated region
  $region2: #{prediction_model_forward.1} parent=0 // pred_check
    _
  $region3: #{prediction_model_forward.1} parent=0 // pred_check_branch
    %12 = sbr.rel (0) target = $region5
  $region4: #{prediction_model_forward.1} parent=0 // pred_region
    _
  $region5: #{prediction_model_forward.1} parent=0 // pred_fallthru
    _
  // Predicated region
  $region6: #{prediction_model_forward.1} parent=0 // pred_check
    _
  $region7: #{prediction_model_forward.1} parent=0 // pred_check_branch
    %14 = sbr.rel (0) target = $region9
  $region8: #{prediction_model_forward.1} parent=0 // pred_region
    _
  $region9: #{prediction_model_forward.1} parent=0 // pred_fallthru
    _
  // Predicated region
  $region10: #{prediction_model_forward.1} parent=0 // pred_check
    _
  $region11: #{prediction_model_forward.1} parent=0 // pred_check_branch
    %16 = sbr.rel (0) target = $region13
  $region12: #{prediction_model_forward.1} parent=0 // pred_region
    _
  $region13: #{prediction_model_forward.1} parent=0 // pred_fallthru
    _
  // Predicated region
  $region14: #{prediction_model_forward.1} parent=0 // pred_check
    _
  $region15: #{prediction_model_forward.1} parent=0 // pred_check_branch
    %18 = sbr.rel (0) target = $region17
  $region16: #{prediction_model_forward.1} parent=0 // pred_region
    _
  $region17: #{prediction_model_forward.1} parent=0 // pred_fallthru
    _
  // Predicated region
  $region18: #{prediction_model_forward.1} parent=0 // pred_check
    _
  $region19: #{prediction_model_forward.1} parent=0 // pred_check_branch
    %20 = sbr.rel (0) target = $region21
  $region20: #{prediction_model_forward.1} parent=0 // pred_region
    _
  $region21: #{prediction_model_forward.1} parent=0 // pred_fallthru
    _
  // Predicated region
  $region22: #{prediction_model_forward.1} parent=0 // pred_check
    _
  $region23: #{prediction_model_forward.1} parent=0 // pred_check_branch
    %22 = sbr.rel (0) target = $region25
  $region24: #{prediction_model_forward.1} parent=0 // pred_region
    _
  $region25: #{prediction_model_forward.1} parent=0 // pred_fallthru
    _
  %v23 = vld [vmem:[%s0] sm:$0xff]
  %v24 = vld [vmem:[%s0 + $0x8] sm:$0xff]
  %v25 = vld [vmem:[%s1] sm:$0xff]
  %v26 = vld [vmem:[%s1 + $0x8] sm:$0xff]
  %v27 = vld [vmem:[%s3] sm:$0x1]
  %v29 = vlaneseq
  %v30 = vshrl.u32 %v29, 7
  %v31 = vsub.s32 0, %v30
  %v32 = vrot.slane %v27, %v31
  %vm34 = vcmask 130048
  %v36 = vsel %vm34, %v23, 0
  %v39 = vsel %vm34, %v24, 0
  %41 = vmatprep.subr.mxu0 0.0
  %42 = vmatpush1.msra.mxu0 %v25
  %43 = vmatprep.subr.mxu0 0.0
  %44 = vmatpush1.msra.mxu0 %v26
  %45 = vmatprep.subr.mxu0 0.0
  %46 = vmatpush1.msra.mxu0 0.0
  %47 = vmatprep.subr.mxu0 0.0
  %48 = vmatpush1.msra.mxu0 0.0
  %49 = vmatprep.subr.mxu0 0.0
  %50 = vmatpush1.msra.mxu0 0.0
  %51 = vmatprep.subr.mxu0 0.0
  %52 = vmatpush1.msra.mxu0 0.0
  %53 = vmatprep.subr.mxu0 0.0
  %54 = vmatpush1.msra.mxu0 0.0
  %55 = vmatprep.subr.mxu0 0.0
  %56 = vmatpush1.msra.mxu0 0.0
  %57 = vmatprep.subr.mxu0 0.0
  %58 = vmatpush1.msra.mxu0 0.0
  %59 = vmatprep.subr.mxu0 0.0
  %60 = vmatpush1.msra.mxu0 0.0
  %61 = vmatprep.subr.mxu0 0.0
  %62 = vmatpush1.msra.mxu0 0.0
  %63 = vmatprep.subr.mxu0 0.0
  %64 = vmatpush1.msra.mxu0 0.0
  %65 = vmatprep.subr.mxu0 0.0
  %66 = vmatpush1.msra.mxu0 0.0
  %67 = vmatprep.subr.mxu0 0.0
  %68 = vmatpush1.msra.mxu0 0.0
  %69 = vmatprep.subr.mxu0 0.0
  %70 = vmatpush1.msra.mxu0 0.0
  %71 = vmatprep.subr.mxu0 0.0
  %72 = vmatpush1.msra.mxu0 0.0
  %73 = vmatprep.subr.mxu0 0.0
  %74 = vmatpush1.msra.mxu0 0.0
  %75 = vmatprep.subr.mxu0 0.0
  %76 = vmatpush1.msra.mxu0 0.0
  %77 = vmatprep.subr.mxu0 0.0
  %78 = vmatpush1.msra.mxu0 0.0
  %79 = vmatprep.subr.mxu0 0.0
  %80 = vmatpush1.msra.mxu0 0.0
  %81 = vmatprep.subr.mxu0 0.0
  %82 = vmatpush1.msra.mxu0 0.0
  %83 = vmatprep.subr.mxu0 0.0
  %84 = vmatpush1.msra.mxu0 0.0
  %85 = vmatprep.subr.mxu0 0.0
  %86 = vmatpush1.msra.mxu0 0.0
  %87 = vmatprep.subr.mxu0 0.0
  %88 = vmatpush1.msra.mxu0 0.0
  %89 = vmatprep.subr.mxu0 0.0
  %90 = vmatpush1.msra.mxu0 0.0
  %91 = vmatprep.subr.mxu0 0.0
  %92 = vmatpush1.msra.mxu0 0.0
  %93 = vmatprep.subr.mxu0 0.0
  %94 = vmatpush1.msra.mxu0 0.0
  %95 = vmatprep.subr.mxu0 0.0
  %96 = vmatpush1.msra.mxu0 0.0
  %97 = vmatprep.subr.mxu0 0.0
  %98 = vmatpush1.msra.mxu0 0.0
  %99 = vmatprep.subr.mxu0 0.0
  %100 = vmatpush1.msra.mxu0 0.0
  %101 = vmatprep.subr.mxu0 0.0
  %102 = vmatpush1.msra.mxu0 0.0
  %103 = vmatprep.subr.mxu0 0.0
  %104 = vmatpush1.msra.mxu0 0.0
  %105 = vmatprep.mubr.f32.mxu0 0.0
  %106 = vmatmul.mubr.f32.gmra.mrb[0].mxu0 %v36
  %v107 = vpop.f32.mrb[0].mxu0
  %v108 = vadd.f32 %v32, %v107
  %v109 = vpop.f32.mrb[0].mxu0
  %110 = vmatprep.mubr.f32.mxu0 0.0
  %111 = vmatmul.mubr.f32.gmra.mrb[0].mxu0 %v39
  %v112 = vpop.f32.mrb[0].mxu0
  %v113 = vadd.f32 %v32, %v112
  %v114 = vpop.f32.mrb[0].mxu0
  %115 = vdwg.mxu0
  %v116 = vld [vmem:[%s2] sm:$0xff]
  %v117 = vld [vmem:[%s2 + $0x8] sm:$0xff]
  %v118 = vld [vmem:[%s2 + $0x10] sm:$0xff]
  %v119 = vld [vmem:[%s2 + $0x18] sm:$0xff]
  %vm120 = vcmask 261120
  %v122 = vsel %vm120, 0.0, 0
  %124 = vmatprep.subr.mxu0 0.0
  %125 = vmatpush1.msra.mxu0 %v116
  %126 = vmatprep.subr.mxu0 0.0
  %127 = vmatpush1.msra.mxu0 %v117
  %128 = vmatprep.subr.mxu0 0.0
  %129 = vmatpush1.msra.mxu0 %v118
  %130 = vmatprep.subr.mxu0 0.0
  %131 = vmatpush1.msra.mxu0 %v119
  %132 = vmatprep.subr.mxu0 0.0
  %133 = vmatpush1.msra.mxu0 0.0
  %134 = vmatprep.subr.mxu0 0.0
  %135 = vmatpush1.msra.mxu0 0.0
  %136 = vmatprep.subr.mxu0 0.0
  %137 = vmatpush1.msra.mxu0 0.0
  %138 = vmatprep.subr.mxu0 0.0
  %139 = vmatpush1.msra.mxu0 0.0
  %140 = vmatprep.subr.mxu0 0.0
  %141 = vmatpush1.msra.mxu0 0.0
  %142 = vmatprep.subr.mxu0 0.0
  %143 = vmatpush1.msra.mxu0 0.0
  %144 = vmatprep.subr.mxu0 0.0
  %145 = vmatpush1.msra.mxu0 0.0
  %146 = vmatprep.subr.mxu0 0.0
  %147 = vmatpush1.msra.mxu0 0.0
  %148 = vmatprep.subr.mxu0 0.0
  %149 = vmatpush1.msra.mxu0 0.0
  %150 = vmatprep.subr.mxu0 0.0
  %151 = vmatpush1.msra.mxu0 0.0
  %152 = vmatprep.subr.mxu0 0.0
  %153 = vmatpush1.msra.mxu0 0.0
  %154 = vmatprep.subr.mxu0 0.0
  %155 = vmatpush1.msra.mxu0 0.0
  %156 = vmatprep.subr.mxu0 0.0
  %157 = vmatpush1.msra.mxu0 0.0
  %158 = vmatprep.subr.mxu0 0.0
  %159 = vmatpush1.msra.mxu0 0.0
  %160 = vmatprep.subr.mxu0 0.0
  %161 = vmatpush1.msra.mxu0 0.0
  %162 = vmatprep.subr.mxu0 0.0
  %163 = vmatpush1.msra.mxu0 0.0
  %164 = vmatprep.subr.mxu0 0.0
  %165 = vmatpush1.msra.mxu0 0.0
  %166 = vmatprep.subr.mxu0 0.0
  %167 = vmatpush1.msra.mxu0 0.0
  %168 = vmatprep.subr.mxu0 0.0
  %169 = vmatpush1.msra.mxu0 0.0
  %170 = vmatprep.subr.mxu0 0.0
  %171 = vmatpush1.msra.mxu0 0.0
  %172 = vmatprep.subr.mxu0 0.0
  %173 = vmatpush1.msra.mxu0 0.0
  %174 = vmatprep.subr.mxu0 0.0
  %175 = vmatpush1.msra.mxu0 0.0
  %176 = vmatprep.subr.mxu0 0.0
  %177 = vmatpush1.msra.mxu0 0.0
  %178 = vmatprep.subr.mxu0 0.0
  %179 = vmatpush1.msra.mxu0 0.0
  %180 = vmatprep.subr.mxu0 0.0
  %181 = vmatpush1.msra.mxu0 0.0
  %182 = vmatprep.subr.mxu0 0.0
  %183 = vmatpush1.msra.mxu0 0.0
  %184 = vmatprep.subr.mxu0 0.0
  %185 = vmatpush1.msra.mxu0 0.0
  %186 = vmatprep.subr.mxu0 0.0
  %187 = vmatpush1.msra.mxu0 0.0
  %188 = vmatprep.mubr.f32.mxu0 0.0
  %189 = vmatmul.mubr.f32.gmra.mrb[0].mxu0 %v122
  %v190 = vpop.f32.mrb[0].mxu0
  %v191 = vadd.f32 0.0, %v190
  %v192 = vpop.f32.mrb[0].mxu0
  %193 = vdwg.mxu0
  %v194 = vadd.f32 %v108, %v191
  %v195 = vxor.u32 %v194, 2147483648
  %v196 = vmul.f32 %v195, 1.442695
  %v197 = vpow.pop %v196
  %v198 = vadd.f32 %v197, 1.0
  %v199 = vrcp.pop %v198
  %v200 = vmul.f32 1.0, %v199
  %v201 = vtanh.pop %v194
  %v202 = vmul.f32 %v200, 0.0
  %204 = vrot.lane.b32.xlu0 %v201, 64
  %v205 = vpop.permute.xlu0 %204
  %v207 = vmul.f32 %v200, %v205
  %209 = vrot.lane.b32.xlu0 %v207, 32
  %v210 = vpop.permute.xlu0 %209
  %v212 = vadd.f32 %v202, %v210
  %v213 = vtanh.pop %v212
  %215 = vrot.lane.b32.xlu0 %v213, 64
  %v216 = vpop.permute.xlu0 %215
  %v218 = vmul.f32 %v200, %v216
  %220 = vrot.lane.b32.xlu0 %v218, 32
  %v221 = vpop.permute.xlu0 %220
  %vm223 = vcmask 254976
  %224 = vst.msk [vmem:[#allocation2] sm:$0x3] %vm223, %v221
  %v225 = vsel %vm120, %v221, 0
  %227 = vmatprep.subr.mxu0 0.0
  %228 = vmatpush1.msra.mxu0 %v116
  %229 = vmatprep.subr.mxu0 0.0
  %230 = vmatpush1.msra.mxu0 %v117
  %231 = vmatprep.subr.mxu0 0.0
  %232 = vmatpush1.msra.mxu0 %v118
  %233 = vmatprep.subr.mxu0 0.0
  %234 = vmatpush1.msra.mxu0 %v119
  %235 = vmatprep.subr.mxu0 0.0
  %236 = vmatpush1.msra.mxu0 0.0
  %237 = vmatprep.subr.mxu0 0.0
  %238 = vmatpush1.msra.mxu0 0.0
  %239 = vmatprep.subr.mxu0 0.0
  %240 = vmatpush1.msra.mxu0 0.0
  %241 = vmatprep.subr.mxu0 0.0
  %242 = vmatpush1.msra.mxu0 0.0
  %243 = vmatprep.subr.mxu0 0.0
  %244 = vmatpush1.msra.mxu0 0.0
  %245 = vmatprep.subr.mxu0 0.0
  %246 = vmatpush1.msra.mxu0 0.0
  %247 = vmatprep.subr.mxu0 0.0
  %248 = vmatpush1.msra.mxu0 0.0
  %249 = vmatprep.subr.mxu0 0.0
  %250 = vmatpush1.msra.mxu0 0.0
  %251 = vmatprep.subr.mxu0 0.0
  %252 = vmatpush1.msra.mxu0 0.0
  %253 = vmatprep.subr.mxu0 0.0
  %254 = vmatpush1.msra.mxu0 0.0
  %255 = vmatprep.subr.mxu0 0.0
  %256 = vmatpush1.msra.mxu0 0.0
  %257 = vmatprep.subr.mxu0 0.0
  %258 = vmatpush1.msra.mxu0 0.0
  %259 = vmatprep.subr.mxu0 0.0
  %260 = vmatpush1.msra.mxu0 0.0
  %261 = vmatprep.subr.mxu0 0.0
  %262 = vmatpush1.msra.mxu0 0.0
  %263 = vmatprep.subr.mxu0 0.0
  %264 = vmatpush1.msra.mxu0 0.0
  %265 = vmatprep.subr.mxu0 0.0
  %266 = vmatpush1.msra.mxu0 0.0
  %267 = vmatprep.subr.mxu0 0.0
  %268 = vmatpush1.msra.mxu0 0.0
  %269 = vmatprep.subr.mxu0 0.0
  %270 = vmatpush1.msra.mxu0 0.0
  %271 = vmatprep.subr.mxu0 0.0
  %272 = vmatpush1.msra.mxu0 0.0
  %273 = vmatprep.subr.mxu0 0.0
  %274 = vmatpush1.msra.mxu0 0.0
  %275 = vmatprep.subr.mxu0 0.0
  %276 = vmatpush1.msra.mxu0 0.0
  %277 = vmatprep.subr.mxu0 0.0
  %278 = vmatpush1.msra.mxu0 0.0
  %279 = vmatprep.subr.mxu0 0.0
  %280 = vmatpush1.msra.mxu0 0.0
  %281 = vmatprep.subr.mxu0 0.0
  %282 = vmatpush1.msra.mxu0 0.0
  %283 = vmatprep.subr.mxu0 0.0
  %284 = vmatpush1.msra.mxu0 0.0
  %285 = vmatprep.subr.mxu0 0.0
  %286 = vmatpush1.msra.mxu0 0.0
  %287 = vmatprep.subr.mxu0 0.0
  %288 = vmatpush1.msra.mxu0 0.0
  %289 = vmatprep.subr.mxu0 0.0
  %290 = vmatpush1.msra.mxu0 0.0
  %291 = vmatprep.mubr.f32.mxu0 0.0
  %292 = vmatmul.mubr.f32.gmra.mrb[0].mxu0 %v225
  %v293 = vpop.f32.mrb[0].mxu0
  %v294 = vadd.f32 0.0, %v293
  %v295 = vpop.f32.mrb[0].mxu0
  %296 = vdwg.mxu0
  %v298 = vrot.slane %v294, 6
  %v300 = vadd.f32 %v108, %v298
  %v301 = vxor.u32 %v300, 2147483648
  %v302 = vmul.f32 %v301, 1.442695
  %v303 = vpow.pop %v302
  %v304 = vadd.f32 %v303, 1.0
  %v305 = vrcp.pop %v304
  %v306 = vmul.f32 1.0, %v305
  %v307 = vtanh.pop %v300
  %v309 = vrot.slane %v212, 6
  %v311 = vmul.f32 %v306, %v309
  %313 = vrot.lane.b32.xlu0 %v307, 64
  %v314 = vpop.permute.xlu0 %313
  %v316 = vmul.f32 %v306, %v314
  %318 = vrot.lane.b32.xlu0 %v316, 32
  %v319 = vpop.permute.xlu0 %318
  %v321 = vadd.f32 %v311, %v319
  %v322 = vtanh.pop %v321
  %324 = vrot.lane.b32.xlu0 %v322, 64
  %v325 = vpop.permute.xlu0 %324
  %v327 = vmul.f32 %v306, %v325
  %329 = vrot.lane.b32.xlu0 %v327, 32
  %v330 = vpop.permute.xlu0 %329
  %vm332 = vcmask 257026
  %333 = vst.msk [vmem:[#allocation2] sm:$0xc] %vm332, %v330
  %v334 = vrot.slane %v327, 2
  %335 = vrot.lane.b32.xlu0 %v334, 32
  %v336 = vpop.permute.xlu0 %335
  %v337 = vsel %vm120, %v336, 0
  %339 = vmatprep.subr.mxu0 0.0
  %340 = vmatpush1.msra.mxu0 %v116
  %341 = vmatprep.subr.mxu0 0.0
  %342 = vmatpush1.msra.mxu0 %v117
  %343 = vmatprep.subr.mxu0 0.0
  %344 = vmatpush1.msra.mxu0 %v118
  %345 = vmatprep.subr.mxu0 0.0
  %346 = vmatpush1.msra.mxu0 %v119
  %347 = vmatprep.subr.mxu0 0.0
  %348 = vmatpush1.msra.mxu0 0.0
  %349 = vmatprep.subr.mxu0 0.0
  %350 = vmatpush1.msra.mxu0 0.0
  %351 = vmatprep.subr.mxu0 0.0
  %352 = vmatpush1.msra.mxu0 0.0
  %353 = vmatprep.subr.mxu0 0.0
  %354 = vmatpush1.msra.mxu0 0.0
  %355 = vmatprep.subr.mxu0 0.0
  %356 = vmatpush1.msra.mxu0 0.0
  %357 = vmatprep.subr.mxu0 0.0
  %358 = vmatpush1.msra.mxu0 0.0
  %359 = vmatprep.subr.mxu0 0.0
  %360 = vmatpush1.msra.mxu0 0.0
  %361 = vmatprep.subr.mxu0 0.0
  %362 = vmatpush1.msra.mxu0 0.0
  %363 = vmatprep.subr.mxu0 0.0
  %364 = vmatpush1.msra.mxu0 0.0
  %365 = vmatprep.subr.mxu0 0.0
  %366 = vmatpush1.msra.mxu0 0.0
  %367 = vmatprep.subr.mxu0 0.0
  %368 = vmatpush1.msra.mxu0 0.0
  %369 = vmatprep.subr.mxu0 0.0
  %370 = vmatpush1.msra.mxu0 0.0
  %371 = vmatprep.subr.mxu0 0.0
  %372 = vmatpush1.msra.mxu0 0.0
  %373 = vmatprep.subr.mxu0 0.0
  %374 = vmatpush1.msra.mxu0 0.0
  %375 = vmatprep.subr.mxu0 0.0
  %376 = vmatpush1.msra.mxu0 0.0
  %377 = vmatprep.subr.mxu0 0.0
  %378 = vmatpush1.msra.mxu0 0.0
  %379 = vmatprep.subr.mxu0 0.0
  %380 = vmatpush1.msra.mxu0 0.0
  %381 = vmatprep.subr.mxu0 0.0
  %382 = vmatpush1.msra.mxu0 0.0
  %383 = vmatprep.subr.mxu0 0.0
  %384 = vmatpush1.msra.mxu0 0.0
  %385 = vmatprep.subr.mxu0 0.0
  %386 = vmatpush1.msra.mxu0 0.0
  %387 = vmatprep.subr.mxu0 0.0
  %388 = vmatpush1.msra.mxu0 0.0
  %389 = vmatprep.subr.mxu0 0.0
  %390 = vmatpush1.msra.mxu0 0.0
  %391 = vmatprep.subr.mxu0 0.0
  %392 = vmatpush1.msra.mxu0 0.0
  %393 = vmatprep.subr.mxu0 0.0
  %394 = vmatpush1.msra.mxu0 0.0
  %395 = vmatprep.subr.mxu0 0.0
  %396 = vmatpush1.msra.mxu0 0.0
  %397 = vmatprep.subr.mxu0 0.0
  %398 = vmatpush1.msra.mxu0 0.0
  %399 = vmatprep.subr.mxu0 0.0
  %400 = vmatpush1.msra.mxu0 0.0
  %401 = vmatprep.subr.mxu0 0.0
  %402 = vmatpush1.msra.mxu0 0.0
  %403 = vmatprep.mubr.f32.mxu0 0.0
  %404 = vmatmul.mubr.f32.gmra.mrb[0].mxu0 %v337
  %v405 = vpop.f32.mrb[0].mxu0
  %v406 = vadd.f32 0.0, %v405
  %v407 = vpop.f32.mrb[0].mxu0
  %408 = vdwg.mxu0
  %v410 = vrot.slane %v406, 4
  %v412 = vadd.f32 %v108, %v410
  %v413 = vxor.u32 %v412, 2147483648
  %v414 = vmul.f32 %v413, 1.442695
  %v415 = vpow.pop %v414
  %v416 = vadd.f32 %v415, 1.0
  %v417 = vrcp.pop %v416
  %v418 = vmul.f32 1.0, %v417
  %v419 = vtanh.pop %v412
  %v421 = vrot.slane %v321, 6
  %v423 = vmul.f32 %v418, %v421
  %425 = vrot.lane.b32.xlu0 %v419, 64
  %v426 = vpop.permute.xlu0 %425
  %v428 = vmul.f32 %v418, %v426
  %430 = vrot.lane.b32.xlu0 %v428, 32
  %v431 = vpop.permute.xlu0 %430
  %v433 = vadd.f32 %v423, %v431
  %v434 = vtanh.pop %v433
  %436 = vrot.lane.b32.xlu0 %v434, 64
  %v437 = vpop.permute.xlu0 %436
  %v439 = vmul.f32 %v418, %v437
  %441 = vrot.lane.b32.xlu0 %v439, 32
  %v442 = vpop.permute.xlu0 %441
  %vm444 = vcmask 259076
  %445 = vst.msk [vmem:[#allocation2] sm:$0x30] %vm444, %v442
  %v446 = vrot.slane %v439, 4
  %447 = vrot.lane.b32.xlu0 %v446, 32
  %v448 = vpop.permute.xlu0 %447
  %v449 = vsel %vm120, %v448, 0
  %451 = vmatprep.subr.mxu0 0.0
  %452 = vmatpush1.msra.mxu0 %v116
  %453 = vmatprep.subr.mxu0 0.0
  %454 = vmatpush1.msra.mxu0 %v117
  %455 = vmatprep.subr.mxu0 0.0
  %456 = vmatpush1.msra.mxu0 %v118
  %457 = vmatprep.subr.mxu0 0.0
  %458 = vmatpush1.msra.mxu0 %v119
  %459 = vmatprep.subr.mxu0 0.0
  %460 = vmatpush1.msra.mxu0 0.0
  %461 = vmatprep.subr.mxu0 0.0
  %462 = vmatpush1.msra.mxu0 0.0
  %463 = vmatprep.subr.mxu0 0.0
  %464 = vmatpush1.msra.mxu0 0.0
  %465 = vmatprep.subr.mxu0 0.0
  %466 = vmatpush1.msra.mxu0 0.0
  %467 = vmatprep.subr.mxu0 0.0
  %468 = vmatpush1.msra.mxu0 0.0
  %469 = vmatprep.subr.mxu0 0.0
  %470 = vmatpush1.msra.mxu0 0.0
  %471 = vmatprep.subr.mxu0 0.0
  %472 = vmatpush1.msra.mxu0 0.0
  %473 = vmatprep.subr.mxu0 0.0
  %474 = vmatpush1.msra.mxu0 0.0
  %475 = vmatprep.subr.mxu0 0.0
  %476 = vmatpush1.msra.mxu0 0.0
  %477 = vmatprep.subr.mxu0 0.0
  %478 = vmatpush1.msra.mxu0 0.0
  %479 = vmatprep.subr.mxu0 0.0
  %480 = vmatpush1.msra.mxu0 0.0
  %481 = vmatprep.subr.mxu0 0.0
  %482 = vmatpush1.msra.mxu0 0.0
  %483 = vmatprep.subr.mxu0 0.0
  %484 = vmatpush1.msra.mxu0 0.0
  %485 = vmatprep.subr.mxu0 0.0
  %486 = vmatpush1.msra.mxu0 0.0
  %487 = vmatprep.subr.mxu0 0.0
  %488 = vmatpush1.msra.mxu0 0.0
  %489 = vmatprep.subr.mxu0 0.0
  %490 = vmatpush1.msra.mxu0 0.0
  %491 = vmatprep.subr.mxu0 0.0
  %492 = vmatpush1.msra.mxu0 0.0
  %493 = vmatprep.subr.mxu0 0.0
  %494 = vmatpush1.msra.mxu0 0.0
  %495 = vmatprep.subr.mxu0 0.0
  %496 = vmatpush1.msra.mxu0 0.0
  %497 = vmatprep.subr.mxu0 0.0
  %498 = vmatpush1.msra.mxu0 0.0
  %499 = vmatprep.subr.mxu0 0.0
  %500 = vmatpush1.msra.mxu0 0.0
  %501 = vmatprep.subr.mxu0 0.0
  %502 = vmatpush1.msra.mxu0 0.0
  %503 = vmatprep.subr.mxu0 0.0
  %504 = vmatpush1.msra.mxu0 0.0
  %505 = vmatprep.subr.mxu0 0.0
  %506 = vmatpush1.msra.mxu0 0.0
  %507 = vmatprep.subr.mxu0 0.0
  %508 = vmatpush1.msra.mxu0 0.0
  %509 = vmatprep.subr.mxu0 0.0
  %510 = vmatpush1.msra.mxu0 0.0
  %511 = vmatprep.subr.mxu0 0.0
  %512 = vmatpush1.msra.mxu0 0.0
  %513 = vmatprep.subr.mxu0 0.0
  %514 = vmatpush1.msra.mxu0 0.0
  %515 = vmatprep.mubr.f32.mxu0 0.0
  %516 = vmatmul.mubr.f32.gmra.mrb[0].mxu0 %v449
  %v517 = vpop.f32.mrb[0].mxu0
  %v518 = vadd.f32 0.0, %v517
  %v519 = vpop.f32.mrb[0].mxu0
  %520 = vdwg.mxu0
  %v522 = vrot.slane %v518, 2
  %v524 = vadd.f32 %v108, %v522
  %v525 = vxor.u32 %v524, 2147483648
  %v526 = vmul.f32 %v525, 1.442695
  %v527 = vpow.pop %v526
  %v528 = vadd.f32 %v527, 1.0
  %v529 = vrcp.pop %v528
  %v530 = vmul.f32 1.0, %v529
  %v531 = vtanh.pop %v524
  %v533 = vrot.slane %v433, 6
  %v535 = vmul.f32 %v530, %v533
  %537 = vrot.lane.b32.xlu0 %v531, 64
  %v538 = vpop.permute.xlu0 %537
  %v540 = vmul.f32 %v530, %v538
  %542 = vrot.lane.b32.xlu0 %v540, 32
  %v543 = vpop.permute.xlu0 %542
  %v545 = vadd.f32 %v535, %v543
  %v546 = vtanh.pop %v545
  %548 = vrot.lane.b32.xlu0 %v546, 64
  %v549 = vpop.permute.xlu0 %548
  %v551 = vmul.f32 %v530, %v549
  %553 = vrot.lane.b32.xlu0 %v551, 32
  %v554 = vpop.permute.xlu0 %553
  %vm556 = vcmask 261126
  %557 = vst.msk [vmem:[#allocation2] sm:$0xc0] %vm556, %v554
  %v558 = vrot.slane %v551, 6
  %559 = vrot.lane.b32.xlu0 %v558, 32
  %v560 = vpop.permute.xlu0 %559
  %v561 = vsel %vm120, %v560, 0
  %563 = vmatprep.subr.mxu0 0.0
  %564 = vmatpush1.msra.mxu0 %v116
  %565 = vmatprep.subr.mxu0 0.0
  %566 = vmatpush1.msra.mxu0 %v117
  %567 = vmatprep.subr.mxu0 0.0
  %568 = vmatpush1.msra.mxu0 %v118
  %569 = vmatprep.subr.mxu0 0.0
  %570 = vmatpush1.msra.mxu0 %v119
  %571 = vmatprep.subr.mxu0 0.0
  %572 = vmatpush1.msra.mxu0 0.0
  %573 = vmatprep.subr.mxu0 0.0
  %574 = vmatpush1.msra.mxu0 0.0
  %575 = vmatprep.subr.mxu0 0.0
  %576 = vmatpush1.msra.mxu0 0.0
  %577 = vmatprep.subr.mxu0 0.0
  %578 = vmatpush1.msra.mxu0 0.0
  %579 = vmatprep.subr.mxu0 0.0
  %580 = vmatpush1.msra.mxu0 0.0
  %581 = vmatprep.subr.mxu0 0.0
  %582 = vmatpush1.msra.mxu0 0.0
  %583 = vmatprep.subr.mxu0 0.0
  %584 = vmatpush1.msra.mxu0 0.0
  %585 = vmatprep.subr.mxu0 0.0
  %586 = vmatpush1.msra.mxu0 0.0
  %587 = vmatprep.subr.mxu0 0.0
  %588 = vmatpush1.msra.mxu0 0.0
  %589 = vmatprep.subr.mxu0 0.0
  %590 = vmatpush1.msra.mxu0 0.0
  %591 = vmatprep.subr.mxu0 0.0
  %592 = vmatpush1.msra.mxu0 0.0
  %593 = vmatprep.subr.mxu0 0.0
  %594 = vmatpush1.msra.mxu0 0.0
  %595 = vmatprep.subr.mxu0 0.0
  %596 = vmatpush1.msra.mxu0 0.0
  %597 = vmatprep.subr.mxu0 0.0
  %598 = vmatpush1.msra.mxu0 0.0
  %599 = vmatprep.subr.mxu0 0.0
  %600 = vmatpush1.msra.mxu0 0.0
  %601 = vmatprep.subr.mxu0 0.0
  %602 = vmatpush1.msra.mxu0 0.0
  %603 = vmatprep.subr.mxu0 0.0
  %604 = vmatpush1.msra.mxu0 0.0
  %605 = vmatprep.subr.mxu0 0.0
  %606 = vmatpush1.msra.mxu0 0.0
  %607 = vmatprep.subr.mxu0 0.0
  %608 = vmatpush1.msra.mxu0 0.0
  %609 = vmatprep.subr.mxu0 0.0
  %610 = vmatpush1.msra.mxu0 0.0
  %611 = vmatprep.subr.mxu0 0.0
  %612 = vmatpush1.msra.mxu0 0.0
  %613 = vmatprep.subr.mxu0 0.0
  %614 = vmatpush1.msra.mxu0 0.0
  %615 = vmatprep.subr.mxu0 0.0
  %616 = vmatpush1.msra.mxu0 0.0
  %617 = vmatprep.subr.mxu0 0.0
  %618 = vmatpush1.msra.mxu0 0.0
  %619 = vmatprep.subr.mxu0 0.0
  %620 = vmatpush1.msra.mxu0 0.0
  %621 = vmatprep.subr.mxu0 0.0
  %622 = vmatpush1.msra.mxu0 0.0
  %623 = vmatprep.subr.mxu0 0.0
  %624 = vmatpush1.msra.mxu0 0.0
  %625 = vmatprep.subr.mxu0 0.0
  %626 = vmatpush1.msra.mxu0 0.0
  %627 = vmatprep.mubr.f32.mxu0 0.0
  %628 = vmatmul.mubr.f32.gmra.mrb[0].mxu0 %v561
  %v629 = vpop.f32.mrb[0].mxu0
  %v630 = vadd.f32 0.0, %v629
  %v631 = vpop.f32.mrb[0].mxu0
  %632 = vdwg.mxu0
  %v633 = vadd.f32 %v113, %v630
  %v634 = vxor.u32 %v633, 2147483648
  %v635 = vmul.f32 %v634, 1.442695
  %v636 = vpow.pop %v635
  %v637 = vadd.f32 %v636, 1.0
  %v638 = vrcp.pop %v637
  %v639 = vmul.f32 1.0, %v638
  %v640 = vtanh.pop %v633
  %v642 = vrot.slane %v545, 6
  %v644 = vmul.f32 %v639, %v642
  %646 = vrot.lane.b32.xlu0 %v640, 64
  %v647 = vpop.permute.xlu0 %646
  %v649 = vmul.f32 %v639, %v647
  %651 = vrot.lane.b32.xlu0 %v649, 32
  %v652 = vpop.permute.xlu0 %651
  %v654 = vadd.f32 %v644, %v652
  %v655 = vtanh.pop %v654
  %657 = vrot.lane.b32.xlu0 %v655, 64
  %v658 = vpop.permute.xlu0 %657
  %v660 = vmul.f32 %v639, %v658
  %662 = vrot.lane.b32.xlu0 %v660, 32
  %v663 = vpop.permute.xlu0 %662
  %665 = vst.msk [vmem:[#allocation2 + $0x8] sm:$0x3] %vm223, %v663
  %v666 = vsel %vm120, %v663, 0
  %668 = vmatprep.subr.mxu0 0.0
  %669 = vmatpush1.msra.mxu0 %v116
  %670 = vmatprep.subr.mxu0 0.0
  %671 = vmatpush1.msra.mxu0 %v117
  %672 = vmatprep.subr.mxu0 0.0
  %673 = vmatpush1.msra.mxu0 %v118
  %674 = vmatprep.subr.mxu0 0.0
  %675 = vmatpush1.msra.mxu0 %v119
  %676 = vmatprep.subr.mxu0 0.0
  %677 = vmatpush1.msra.mxu0 0.0
  %678 = vmatprep.subr.mxu0 0.0
  %679 = vmatpush1.msra.mxu0 0.0
  %680 = vmatprep.subr.mxu0 0.0
  %681 = vmatpush1.msra.mxu0 0.0
  %682 = vmatprep.subr.mxu0 0.0
  %683 = vmatpush1.msra.mxu0 0.0
  %684 = vmatprep.subr.mxu0 0.0
  %685 = vmatpush1.msra.mxu0 0.0
  %686 = vmatprep.subr.mxu0 0.0
  %687 = vmatpush1.msra.mxu0 0.0
  %688 = vmatprep.subr.mxu0 0.0
  %689 = vmatpush1.msra.mxu0 0.0
  %690 = vmatprep.subr.mxu0 0.0
  %691 = vmatpush1.msra.mxu0 0.0
  %692 = vmatprep.subr.mxu0 0.0
  %693 = vmatpush1.msra.mxu0 0.0
  %694 = vmatprep.subr.mxu0 0.0
  %695 = vmatpush1.msra.mxu0 0.0
  %696 = vmatprep.subr.mxu0 0.0
  %697 = vmatpush1.msra.mxu0 0.0
  %698 = vmatprep.subr.mxu0 0.0
  %699 = vmatpush1.msra.mxu0 0.0
  %700 = vmatprep.subr.mxu0 0.0
  %701 = vmatpush1.msra.mxu0 0.0
  %702 = vmatprep.subr.mxu0 0.0
  %703 = vmatpush1.msra.mxu0 0.0
  %704 = vmatprep.subr.mxu0 0.0
  %705 = vmatpush1.msra.mxu0 0.0
  %706 = vmatprep.subr.mxu0 0.0
  %707 = vmatpush1.msra.mxu0 0.0
  %708 = vmatprep.subr.mxu0 0.0
  %709 = vmatpush1.msra.mxu0 0.0
  %710 = vmatprep.subr.mxu0 0.0
  %711 = vmatpush1.msra.mxu0 0.0
  %712 = vmatprep.subr.mxu0 0.0
  %713 = vmatpush1.msra.mxu0 0.0
  %714 = vmatprep.subr.mxu0 0.0
  %715 = vmatpush1.msra.mxu0 0.0
  %716 = vmatprep.subr.mxu0 0.0
  %717 = vmatpush1.msra.mxu0 0.0
  %718 = vmatprep.subr.mxu0 0.0
  %719 = vmatpush1.msra.mxu0 0.0
  %720 = vmatprep.subr.mxu0 0.0
  %721 = vmatpush1.msra.mxu0 0.0
  %722 = vmatprep.subr.mxu0 0.0
  %723 = vmatpush1.msra.mxu0 0.0
  %724 = vmatprep.subr.mxu0 0.0
  %725 = vmatpush1.msra.mxu0 0.0
  %726 = vmatprep.subr.mxu0 0.0
  %727 = vmatpush1.msra.mxu0 0.0
  %728 = vmatprep.subr.mxu0 0.0
  %729 = vmatpush1.msra.mxu0 0.0
  %730 = vmatprep.subr.mxu0 0.0
  %731 = vmatpush1.msra.mxu0 0.0
  %732 = vmatprep.mubr.f32.mxu0 0.0
  %733 = vmatmul.mubr.f32.gmra.mrb[0].mxu0 %v666
  %v734 = vpop.f32.mrb[0].mxu0
  %v735 = vadd.f32 0.0, %v734
  %v736 = vpop.f32.mrb[0].mxu0
  %737 = vdwg.mxu0
  %v739 = vrot.slane %v735, 6
  %v741 = vadd.f32 %v113, %v739
  %v742 = vxor.u32 %v741, 2147483648
  %v743 = vmul.f32 %v742, 1.442695
  %v744 = vpow.pop %v743
  %v745 = vadd.f32 %v744, 1.0
  %v746 = vrcp.pop %v745
  %v747 = vmul.f32 1.0, %v746
  %v748 = vtanh.pop %v741
  %v750 = vrot.slane %v654, 6
  %v752 = vmul.f32 %v747, %v750
  %754 = vrot.lane.b32.xlu0 %v748, 64
  %v755 = vpop.permute.xlu0 %754
  %v757 = vmul.f32 %v747, %v755
  %759 = vrot.lane.b32.xlu0 %v757, 32
  %v760 = vpop.permute.xlu0 %759
  %v762 = vadd.f32 %v752, %v760
  %v763 = vtanh.pop %v762
  %765 = vrot.lane.b32.xlu0 %v763, 64
  %v766 = vpop.permute.xlu0 %765
  %v768 = vmul.f32 %v747, %v766
  %770 = vrot.lane.b32.xlu0 %v768, 32
  %v771 = vpop.permute.xlu0 %770
  %773 = vst.msk [vmem:[#allocation2 + $0x8] sm:$0xc] %vm332, %v771
  %v774 = vrot.slane %v768, 2
  %775 = vrot.lane.b32.xlu0 %v774, 32
  %v776 = vpop.permute.xlu0 %775
  %v777 = vsel %vm120, %v776, 0
  %779 = vmatprep.subr.mxu0 0.0
  %780 = vmatpush1.msra.mxu0 %v116
  %781 = vmatprep.subr.mxu0 0.0
  %782 = vmatpush1.msra.mxu0 %v117
  %783 = vmatprep.subr.mxu0 0.0
  %784 = vmatpush1.msra.mxu0 %v118
  %785 = vmatprep.subr.mxu0 0.0
  %786 = vmatpush1.msra.mxu0 %v119
  %787 = vmatprep.subr.mxu0 0.0
  %788 = vmatpush1.msra.mxu0 0.0
  %789 = vmatprep.subr.mxu0 0.0
  %790 = vmatpush1.msra.mxu0 0.0
  %791 = vmatprep.subr.mxu0 0.0
  %792 = vmatpush1.msra.mxu0 0.0
  %793 = vmatprep.subr.mxu0 0.0
  %794 = vmatpush1.msra.mxu0 0.0
  %795 = vmatprep.subr.mxu0 0.0
  %796 = vmatpush1.msra.mxu0 0.0
  %797 = vmatprep.subr.mxu0 0.0
  %798 = vmatpush1.msra.mxu0 0.0
  %799 = vmatprep.subr.mxu0 0.0
  %800 = vmatpush1.msra.mxu0 0.0
  %801 = vmatprep.subr.mxu0 0.0
  %802 = vmatpush1.msra.mxu0 0.0
  %803 = vmatprep.subr.mxu0 0.0
  %804 = vmatpush1.msra.mxu0 0.0
  %805 = vmatprep.subr.mxu0 0.0
  %806 = vmatpush1.msra.mxu0 0.0
  %807 = vmatprep.subr.mxu0 0.0
  %808 = vmatpush1.msra.mxu0 0.0
  %809 = vmatprep.subr.mxu0 0.0
  %810 = vmatpush1.msra.mxu0 0.0
  %811 = vmatprep.subr.mxu0 0.0
  %812 = vmatpush1.msra.mxu0 0.0
  %813 = vmatprep.subr.mxu0 0.0
  %814 = vmatpush1.msra.mxu0 0.0
  %815 = vmatprep.subr.mxu0 0.0
  %816 = vmatpush1.msra.mxu0 0.0
  %817 = vmatprep.subr.mxu0 0.0
  %818 = vmatpush1.msra.mxu0 0.0
  %819 = vmatprep.subr.mxu0 0.0
  %820 = vmatpush1.msra.mxu0 0.0
  %821 = vmatprep.subr.mxu0 0.0
  %822 = vmatpush1.msra.mxu0 0.0
  %823 = vmatprep.subr.mxu0 0.0
  %824 = vmatpush1.msra.mxu0 0.0
  %825 = vmatprep.subr.mxu0 0.0
  %826 = vmatpush1.msra.mxu0 0.0
  %827 = vmatprep.subr.mxu0 0.0
  %828 = vmatpush1.msra.mxu0 0.0
  %829 = vmatprep.subr.mxu0 0.0
  %830 = vmatpush1.msra.mxu0 0.0
  %831 = vmatprep.subr.mxu0 0.0
  %832 = vmatpush1.msra.mxu0 0.0
  %833 = vmatprep.subr.mxu0 0.0
  %834 = vmatpush1.msra.mxu0 0.0
  %835 = vmatprep.subr.mxu0 0.0
  %836 = vmatpush1.msra.mxu0 0.0
  %837 = vmatprep.subr.mxu0 0.0
  %838 = vmatpush1.msra.mxu0 0.0
  %839 = vmatprep.subr.mxu0 0.0
  %840 = vmatpush1.msra.mxu0 0.0
  %841 = vmatprep.subr.mxu0 0.0
  %842 = vmatpush1.msra.mxu0 0.0
  %843 = vmatprep.mubr.f32.mxu0 0.0
  %844 = vmatmul.mubr.f32.gmra.mrb[0].mxu0 %v777
  %v845 = vpop.f32.mrb[0].mxu0
  %v846 = vadd.f32 0.0, %v845
  %v847 = vpop.f32.mrb[0].mxu0
  %848 = vdwg.mxu0
  %v850 = vrot.slane %v846, 4
  %v852 = vadd.f32 %v113, %v850
  %v853 = vxor.u32 %v852, 2147483648
  %v854 = vmul.f32 %v853, 1.442695
  %v855 = vpow.pop %v854
  %v856 = vadd.f32 %v855, 1.0
  %v857 = vrcp.pop %v856
  %v858 = vmul.f32 1.0, %v857
  %v859 = vtanh.pop %v852
  %v861 = vrot.slane %v762, 6
  %v863 = vmul.f32 %v858, %v861
  %865 = vrot.lane.b32.xlu0 %v859, 64
  %v866 = vpop.permute.xlu0 %865
  %v868 = vmul.f32 %v858, %v866
  %870 = vrot.lane.b32.xlu0 %v868, 32
  %v871 = vpop.permute.xlu0 %870
  %v873 = vadd.f32 %v863, %v871
  %v874 = vtanh.pop %v873
  %876 = vrot.lane.b32.xlu0 %v874, 64
  %v877 = vpop.permute.xlu0 %876
  %v879 = vmul.f32 %v858, %v877
  %881 = vrot.lane.b32.xlu0 %v879, 32
  %v882 = vpop.permute.xlu0 %881
  %884 = vst.msk [vmem:[#allocation2 + $0x8] sm:$0x30] %vm444, %v882
  %v885 = vrot.slane %v879, 4
  %886 = vrot.lane.b32.xlu0 %v885, 32
  %v887 = vpop.permute.xlu0 %886
  %v888 = vsel %vm120, %v887, 0
  %890 = vmatprep.subr.mxu0 0.0
  %891 = vmatpush1.msra.mxu0 %v116
  %892 = vmatprep.subr.mxu0 0.0
  %893 = vmatpush1.msra.mxu0 %v117
  %894 = vmatprep.subr.mxu0 0.0
  %895 = vmatpush1.msra.mxu0 %v118
  %896 = vmatprep.subr.mxu0 0.0
  %897 = vmatpush1.msra.mxu0 %v119
  %898 = vmatprep.subr.mxu0 0.0
  %899 = vmatpush1.msra.mxu0 0.0
  %900 = vmatprep.subr.mxu0 0.0
  %901 = vmatpush1.msra.mxu0 0.0
  %902 = vmatprep.subr.mxu0 0.0
  %903 = vmatpush1.msra.mxu0 0.0
  %904 = vmatprep.subr.mxu0 0.0
  %905 = vmatpush1.msra.mxu0 0.0
  %906 = vmatprep.subr.mxu0 0.0
  %907 = vmatpush1.msra.mxu0 0.0
  %908 = vmatprep.subr.mxu0 0.0
  %909 = vmatpush1.msra.mxu0 0.0
  %910 = vmatprep.subr.mxu0 0.0
  %911 = vmatpush1.msra.mxu0 0.0
  %912 = vmatprep.subr.mxu0 0.0
  %913 = vmatpush1.msra.mxu0 0.0
  %914 = vmatprep.subr.mxu0 0.0
  %915 = vmatpush1.msra.mxu0 0.0
  %916 = vmatprep.subr.mxu0 0.0
  %917 = vmatpush1.msra.mxu0 0.0
  %918 = vmatprep.subr.mxu0 0.0
  %919 = vmatpush1.msra.mxu0 0.0
  %920 = vmatprep.subr.mxu0 0.0
  %921 = vmatpush1.msra.mxu0 0.0
  %922 = vmatprep.subr.mxu0 0.0
  %923 = vmatpush1.msra.mxu0 0.0
  %924 = vmatprep.subr.mxu0 0.0
  %925 = vmatpush1.msra.mxu0 0.0
  %926 = vmatprep.subr.mxu0 0.0
  %927 = vmatpush1.msra.mxu0 0.0
  %928 = vmatprep.subr.mxu0 0.0
  %929 = vmatpush1.msra.mxu0 0.0
  %930 = vmatprep.subr.mxu0 0.0
  %931 = vmatpush1.msra.mxu0 0.0
  %932 = vmatprep.subr.mxu0 0.0
  %933 = vmatpush1.msra.mxu0 0.0
  %934 = vmatprep.subr.mxu0 0.0
  %935 = vmatpush1.msra.mxu0 0.0
  %936 = vmatprep.subr.mxu0 0.0
  %937 = vmatpush1.msra.mxu0 0.0
  %938 = vmatprep.subr.mxu0 0.0
  %939 = vmatpush1.msra.mxu0 0.0
  %940 = vmatprep.subr.mxu0 0.0
  %941 = vmatpush1.msra.mxu0 0.0
  %942 = vmatprep.subr.mxu0 0.0
  %943 = vmatpush1.msra.mxu0 0.0
  %944 = vmatprep.subr.mxu0 0.0
  %945 = vmatpush1.msra.mxu0 0.0
  %946 = vmatprep.subr.mxu0 0.0
  %947 = vmatpush1.msra.mxu0 0.0
  %948 = vmatprep.subr.mxu0 0.0
  %949 = vmatpush1.msra.mxu0 0.0
  %950 = vmatprep.subr.mxu0 0.0
  %951 = vmatpush1.msra.mxu0 0.0
  %952 = vmatprep.subr.mxu0 0.0
  %953 = vmatpush1.msra.mxu0 0.0
  %954 = vmatprep.mubr.f32.mxu0 0.0
  %955 = vmatmul.mubr.f32.gmra.mrb[0].mxu0 %v888
  %v956 = vpop.f32.mrb[0].mxu0
  %v957 = vadd.f32 0.0, %v956
  %v958 = vpop.f32.mrb[0].mxu0
  %959 = vdwg.mxu0
  %v961 = vrot.slane %v957, 2
  %v963 = vadd.f32 %v113, %v961
  %v964 = vxor.u32 %v963, 2147483648
  %v965 = vmul.f32 %v964, 1.442695
  %v966 = vpow.pop %v965
  %v967 = vadd.f32 %v966, 1.0
  %v968 = vrcp.pop %v967
  %v969 = vmul.f32 1.0, %v968
  %v970 = vtanh.pop %v963
  %v972 = vrot.slane %v873, 6
  %v974 = vmul.f32 %v969, %v972
  %976 = vrot.lane.b32.xlu0 %v970, 64
  %v977 = vpop.permute.xlu0 %976
  %v979 = vmul.f32 %v969, %v977
  %981 = vrot.lane.b32.xlu0 %v979, 32
  %v982 = vpop.permute.xlu0 %981
  %v984 = vadd.f32 %v974, %v982
  %v985 = vtanh.pop %v984
  %987 = vrot.lane.b32.xlu0 %v985, 64
  %v988 = vpop.permute.xlu0 %987
  %v990 = vmul.f32 %v969, %v988
  %992 = vrot.lane.b32.xlu0 %v990, 32
  %v993 = vpop.permute.xlu0 %992
  %995 = vst.msk [vmem:[#allocation2 + $0x8] sm:$0xc0] %vm556, %v993
  %v996 = vld [vmem:[#allocation2] sm:$0xff]
  %v997 = vld [vmem:[#allocation2 + $0x8] sm:$0xff]
  %v998 = vld [vmem:[%s4] sm:$0xff]
  %v999 = vld [vmem:[%s4 + $0x8] sm:$0xff]
  %v1000 = vld [vmem:[%s4 + $0x10] sm:$0xff]
  %v1001 = vld [vmem:[%s4 + $0x18] sm:$0xff]
  %v1002 = vld [vmem:[%s5] sm:$0x1]
  %v1004 = vlaneseq
  %v1005 = vshrl.u32 %v1004, 7
  %v1006 = vsub.s32 0, %v1005
  %v1007 = vrot.slane %v1002, %v1006
  %v1010 = vsel %vm120, %v996, 0
  %v1013 = vsel %vm120, %v997, 0
  %1015 = vmatprep.subr.mxu0 0.0
  %1016 = vmatpush1.msra.mxu0 %v998
  %1017 = vmatprep.subr.mxu0 0.0
  %1018 = vmatpush1.msra.mxu0 %v999
  %1019 = vmatprep.subr.mxu0 0.0
  %1020 = vmatpush1.msra.mxu0 %v1000
  %1021 = vmatprep.subr.mxu0 0.0
  %1022 = vmatpush1.msra.mxu0 %v1001
  %1023 = vmatprep.subr.mxu0 0.0
  %1024 = vmatpush1.msra.mxu0 0.0
  %1025 = vmatprep.subr.mxu0 0.0
  %1026 = vmatpush1.msra.mxu0 0.0
  %1027 = vmatprep.subr.mxu0 0.0
  %1028 = vmatpush1.msra.mxu0 0.0
  %1029 = vmatprep.subr.mxu0 0.0
  %1030 = vmatpush1.msra.mxu0 0.0
  %1031 = vmatprep.subr.mxu0 0.0
  %1032 = vmatpush1.msra.mxu0 0.0
  %1033 = vmatprep.subr.mxu0 0.0
  %1034 = vmatpush1.msra.mxu0 0.0
  %1035 = vmatprep.subr.mxu0 0.0
  %1036 = vmatpush1.msra.mxu0 0.0
  %1037 = vmatprep.subr.mxu0 0.0
  %1038 = vmatpush1.msra.mxu0 0.0
  %1039 = vmatprep.subr.mxu0 0.0
  %1040 = vmatpush1.msra.mxu0 0.0
  %1041 = vmatprep.subr.mxu0 0.0
  %1042 = vmatpush1.msra.mxu0 0.0
  %1043 = vmatprep.subr.mxu0 0.0
  %1044 = vmatpush1.msra.mxu0 0.0
  %1045 = vmatprep.subr.mxu0 0.0
  %1046 = vmatpush1.msra.mxu0 0.0
  %1047 = vmatprep.subr.mxu0 0.0
  %1048 = vmatpush1.msra.mxu0 0.0
  %1049 = vmatprep.subr.mxu0 0.0
  %1050 = vmatpush1.msra.mxu0 0.0
  %1051 = vmatprep.subr.mxu0 0.0
  %1052 = vmatpush1.msra.mxu0 0.0
  %1053 = vmatprep.subr.mxu0 0.0
  %1054 = vmatpush1.msra.mxu0 0.0
  %1055 = vmatprep.subr.mxu0 0.0
  %1056 = vmatpush1.msra.mxu0 0.0
  %1057 = vmatprep.subr.mxu0 0.0
  %1058 = vmatpush1.msra.mxu0 0.0
  %1059 = vmatprep.subr.mxu0 0.0
  %1060 = vmatpush1.msra.mxu0 0.0
  %1061 = vmatprep.subr.mxu0 0.0
  %1062 = vmatpush1.msra.mxu0 0.0
  %1063 = vmatprep.subr.mxu0 0.0
  %1064 = vmatpush1.msra.mxu0 0.0
  %1065 = vmatprep.subr.mxu0 0.0
  %1066 = vmatpush1.msra.mxu0 0.0
  %1067 = vmatprep.subr.mxu0 0.0
  %1068 = vmatpush1.msra.mxu0 0.0
  %1069 = vmatprep.subr.mxu0 0.0
  %1070 = vmatpush1.msra.mxu0 0.0
  %1071 = vmatprep.subr.mxu0 0.0
  %1072 = vmatpush1.msra.mxu0 0.0
  %1073 = vmatprep.subr.mxu0 0.0
  %1074 = vmatpush1.msra.mxu0 0.0
  %1075 = vmatprep.subr.mxu0 0.0
  %1076 = vmatpush1.msra.mxu0 0.0
  %1077 = vmatprep.subr.mxu0 0.0
  %1078 = vmatpush1.msra.mxu0 0.0
  %1079 = vmatprep.mubr.f32.mxu0 0.0
  %1080 = vmatmul.mubr.f32.gmra.mrb[0].mxu0 %v1010
  %v1081 = vpop.f32.mrb[0].mxu0
  %v1082 = vadd.f32 %v1007, %v1081
  %v1083 = vpop.f32.mrb[0].mxu0
  %1084 = vmatprep.mubr.f32.mxu0 0.0
  %1085 = vmatmul.mubr.f32.gmra.mrb[0].mxu0 %v1013
  %v1086 = vpop.f32.mrb[0].mxu0
  %v1087 = vadd.f32 %v1007, %v1086
  %v1088 = vpop.f32.mrb[0].mxu0
  %1089 = vdwg.mxu0
  %vm1090 = vcmask 15360
  %1091 = vst.msk [vmem:[%s6] sm:$0xff] %vm1090, %v1082
  %1092 = vst.msk [vmem:[%s6 + $0x8] sm:$0xff] %vm1090, %v1087
  // Predicated region
  $region26: #{prediction_model_forward.1} parent=0 // pred_check
    _
  $region27: #{prediction_model_forward.1} parent=0 // pred_check_branch
    %1094 = sbr.rel (0) target = $region29
  $region28: #{prediction_model_forward.1} parent=0 // pred_region
    _
  $region29: #{prediction_model_forward.1} parent=0 // pred_fallthru
    _
  // Predicated region
  $region30: #{prediction_model_forward.1} parent=0 // pred_check
    _
  $region31: #{prediction_model_forward.1} parent=0 // pred_check_branch
    %1096 = sbr.rel (0) target = $region33
  $region32: #{prediction_model_forward.1} parent=0 // pred_region
    _
  $region33: #{prediction_model_forward.1} parent=0 // pred_fallthru
    _

</llo_original>
